<compile_context>
chip_gen: v5e
topology: v5e:2x2
jax: 0.10.0
libtpu: 0.0.40
codegen_flags: <defaults>
</compile_context>

<pallas_src>
import numpy as np
import jax
import jax.numpy as jnp
from jax.experimental import pallas as pl
from jax.experimental.pallas import tpu as pltpu


def diffusion_train_kernel(cond_ref, x0_ref, noise_ref, w_ref, loss_ref):
    # fused per-(batch, channel) conditioning: [:,0]=sqrt(a_bar), [:,1]=sqrt(1-a_bar),
    # [:,2]=time+label bias.  All broadcast over the lane (spatial) axis.
    a = cond_ref[:, 0:1]        # (BC, 1)
    s = cond_ref[:, 1:2]        # (BC, 1)
    bias = cond_ref[:, 2:3]     # (BC, 1)

    x0 = x0_ref[...]            # (BC, HW_tile)
    noise = noise_ref[...]      # (BC, HW_tile)

    # q_sample: x_t = sqrt(alpha_bar_t) * x0 + sqrt(1 - alpha_bar_t) * noise
    x_t = a * x0 + s * noise

    # synthetic conditional eps-model: block-diagonal channel mix (one matmul
    # over the whole batch) + per-(batch, channel) conditioning bias
    eps = jnp.dot(w_ref[...], x_t, preferred_element_type=jnp.float32)
    eps = eps + bias

    # MSE loss, reduction='none'
    loss_ref[...] = (eps - noise) ** 2


def _pick_hw_tile(hw, bc, bytes_per_elem=4, vmem_budget=8 * 1024 * 1024):
    """Largest spatial tile (multiple of 128, dividing HW) such that the three
    pipelined arrays (x0, noise, loss), double-buffered, fit the VMEM budget."""
    max_tile = max(vmem_budget // (6 * bc * bytes_per_elem), 128)
    if hw <= max_tile:
        return hw
    tile = (max_tile // 128) * 128
    while tile > 128 and hw % tile != 0:
        tile -= 128
    if hw % tile != 0:
        return hw
    return tile


def gaussian_diffusion_trainer_forward(x_0, labels, t, noise,
                                       sqrt_alphas_bar, sqrt_one_minus_alphas_bar,
                                       w_mix, time_emb, label_emb):
    """x_0: (B, C, H, W) NCHW float32. Returns per-element loss, same shape."""
    B, C, H, W = x_0.shape
    HW = H * W
    BC = B * C

    # fold batch into the sublane axis: (B, C, H, W) -> (B*C, H*W)
    x0_f = x_0.reshape(BC, HW).astype(jnp.float32)
    nz_f = noise.reshape(BC, HW).astype(jnp.float32)

    # `extract(...)`: gather per-timestep coefficients, broadcast per (batch, channel) row,
    # then fuse with the conditioning bias into a single (BC, 3) array -> one DMA.
    a_row = jnp.repeat(sqrt_alphas_bar[t].astype(jnp.float32), C)                # (BC,)
    s_row = jnp.repeat(sqrt_one_minus_alphas_bar[t].astype(jnp.float32), C)      # (BC,)
    bias_row = (time_emb[t] + label_emb[labels]).astype(jnp.float32).reshape(BC)  # (BC,)
    cond = jnp.stack([a_row, s_row, bias_row], axis=-1)                          # (BC, 3)

    # block-diagonal channel-mix weight: one (BC, BC) matmul covers the whole batch
    w_bd = jnp.kron(jnp.eye(B, dtype=jnp.float32), w_mix.astype(jnp.float32))    # (BC, BC)

    hw_tile = _pick_hw_tile(HW, BC)
    n_tiles = HW // hw_tile

    grid_spec = pltpu.PrefetchScalarGridSpec(
        num_scalar_prefetch=0,
        grid=(n_tiles,),                                     # single step at toy sizes
        in_specs=[
            pl.BlockSpec((BC, 3), lambda j: (0, 0)),         # fused conditioning (resident)
            pl.BlockSpec((BC, hw_tile), lambda j: (0, j)),   # x_0
            pl.BlockSpec((BC, hw_tile), lambda j: (0, j)),   # noise
            pl.BlockSpec((BC, BC), lambda j: (0, 0)),        # block-diag mix weight (resident)
        ],
        out_specs=pl.BlockSpec((BC, hw_tile), lambda j: (0, j)),
    )

    cost = pl.CostEstimate(
        flops=2 * BC * BC * HW,
        transcendentals=0,
        bytes_accessed=(3 * BC * HW + BC * BC + BC * 3) * 4,
    )

    loss = pl.pallas_call(
        diffusion_train_kernel,
        out_shape=jax.ShapeDtypeStruct((BC, HW), jnp.float32),
        grid_spec=grid_spec,
        compiler_params=pltpu.CompilerParams(
            dimension_semantics=("parallel",)),
        cost_estimate=cost,
    )(cond, x0_f, nz_f, w_bd)

    return loss.reshape(B, C, H, W)


if __name__ == "__main__":
    # module hyper-params (small, consistent with the forward)
    B, C, H, W = 2, 4, 16, 16
    T = 100
    beta_1, beta_T = 1e-4, 0.02
    NUM_CLASSES = 10

    # registered buffers (computed in float64 like the PyTorch module)
    betas = np.linspace(beta_1, beta_T, T, dtype=np.float64)
    alphas = 1.0 - betas
    alphas_bar = np.cumprod(alphas, axis=0)
    sqrt_alphas_bar = jnp.asarray(np.sqrt(alphas_bar), dtype=jnp.float32)
    sqrt_one_minus_alphas_bar = jnp.asarray(np.sqrt(1.0 - alphas_bar),
                                            dtype=jnp.float32)

    # deterministic synthetic model parameters
    key = jax.random.PRNGKey(0)
    k_x, k_t, k_n, k_lab, k_w, k_te, k_le = jax.random.split(key, 7)
    w_mix = 0.1 * jax.random.normal(k_w, (C, C), dtype=jnp.float32)
    time_emb = 0.1 * jax.random.normal(k_te, (T, C), dtype=jnp.float32)
    label_emb = 0.1 * jax.random.normal(k_le, (NUM_CLASSES, C), dtype=jnp.float32)

    # forward-pass randomness (torch.randint / torch.randn_like equivalents)
    x_0 = jax.random.normal(k_x, (B, C, H, W), dtype=jnp.float32)
    labels = jax.random.randint(k_lab, (B,), 0, NUM_CLASSES, dtype=jnp.int32)
    t = jax.random.randint(k_t, (B,), 0, T, dtype=jnp.int32)
    noise = jax.random.normal(k_n, (B, C, H, W), dtype=jnp.float32)

    loss = gaussian_diffusion_trainer_forward(
        x_0, labels, t, noise,
        sqrt_alphas_bar, sqrt_one_minus_alphas_bar,
        w_mix, time_emb, label_emb)
    loss = jax.block_until_ready(loss)

    # pure-JAX reference check
    sab = sqrt_alphas_bar[t].reshape(B, 1, 1, 1)
    s1m = sqrt_one_minus_alphas_bar[t].reshape(B, 1, 1, 1)
    x_t_ref = sab * x_0 + s1m * noise
    eps_ref = jnp.einsum('oc,bchw->bohw', w_mix, x_t_ref) \
        + (time_emb[t] + label_emb[labels]).reshape(B, C, 1, 1)
    loss_ref = (eps_ref - noise) ** 2
    assert loss.shape == (B, C, H, W)
    np.testing.assert_allclose(np.asarray(loss), np.asarray(loss_ref),
                               rtol=1e-5, atol=1e-5)

    print("KERNEL_OK")
</pallas_src>

<mosaic_0001>
module attributes {stable_mosaic.version = 11 : i64} {
  func.func @diffusion_train_kernel(%arg0: i32, %arg1: memref<8x3xf32, #tpu.memory_space<vmem>>, %arg2: memref<8x256xf32, #tpu.memory_space<vmem>>, %arg3: memref<8x256xf32, #tpu.memory_space<vmem>>, %arg4: memref<8x8xf32, #tpu.memory_space<vmem>>, %arg5: memref<8x256xf32, #tpu.memory_space<vmem>>) attributes {dimension_semantics = [#tpu.dimension_semantics<parallel>], iteration_bounds = array<i64: 1>, scalar_prefetch = 0 : i64, scratch_operands = 0 : i64, tpu.core_type = #tpu.core_type<tc>, window_params = [{pipeline_mode = #tpu.pipeline_mode<synchronous>, transform_indices = @transform_0, window_bounds = array<i64: 8, 3>}, {transform_indices = @transform_1, window_bounds = array<i64: 8, 256>}, {transform_indices = @transform_2, window_bounds = array<i64: 8, 256>}, {pipeline_mode = #tpu.pipeline_mode<synchronous>, transform_indices = @transform_3, window_bounds = array<i64: 8, 8>}, {transform_indices = @transform_4, window_bounds = array<i64: 8, 256>}]} {
    %c0 = arith.constant 0 : index
    %c0_0 = arith.constant 0 : index
    %0 = vector.load %arg1[%c0, %c0_0] : memref<8x3xf32, #tpu.memory_space<vmem>>, vector<8x1xf32>
    %c0_1 = arith.constant 0 : index
    %c1 = arith.constant 1 : index
    %1 = vector.load %arg1[%c0_1, %c1] : memref<8x3xf32, #tpu.memory_space<vmem>>, vector<8x1xf32>
    %c0_2 = arith.constant 0 : index
    %c2 = arith.constant 2 : index
    %2 = vector.load %arg1[%c0_2, %c2] : memref<8x3xf32, #tpu.memory_space<vmem>>, vector<8x1xf32>
    %c0_3 = arith.constant 0 : index
    %c0_4 = arith.constant 0 : index
    %3 = vector.load %arg2[%c0_3, %c0_4] : memref<8x256xf32, #tpu.memory_space<vmem>>, vector<8x256xf32>
    %c0_5 = arith.constant 0 : index
    %c0_6 = arith.constant 0 : index
    %4 = vector.load %arg3[%c0_5, %c0_6] : memref<8x256xf32, #tpu.memory_space<vmem>>, vector<8x256xf32>
    %5 = vector.broadcast %0 : vector<8x1xf32> to vector<8x256xf32>
    %6 = arith.mulf %5, %3 : vector<8x256xf32>
    %7 = vector.broadcast %1 : vector<8x1xf32> to vector<8x256xf32>
    %8 = arith.mulf %7, %4 : vector<8x256xf32>
    %9 = arith.addf %6, %8 : vector<8x256xf32>
    %c0_7 = arith.constant 0 : index
    %c0_8 = arith.constant 0 : index
    %10 = vector.load %arg4[%c0_7, %c0_8] : memref<8x8xf32, #tpu.memory_space<vmem>>, vector<8x8xf32>
    %cst = arith.constant dense<0.000000e+00> : vector<8x256xf32>
    %11 = tpu.matmul %10, %9, %cst {dimension_numbers = #tpu.dot_dimension_numbers<[1], [0], [0], [1], [0, 0, 1, 1], [], []>} : vector<8x8xf32>, vector<8x256xf32>, vector<8x256xf32> -> vector<8x256xf32>
    %12 = vector.broadcast %2 : vector<8x1xf32> to vector<8x256xf32>
    %13 = arith.addf %11, %12 : vector<8x256xf32>
    %14 = arith.subf %13, %4 : vector<8x256xf32>
    %15 = arith.mulf %14, %14 : vector<8x256xf32>
    %c0_9 = arith.constant 0 : index
    %c0_10 = arith.constant 0 : index
    %16 = vector.load %arg5[%c0_9, %c0_10] : memref<8x256xf32, #tpu.memory_space<vmem>>, vector<8x256xf32>
    tpu.vector_store %arg5[%c0_9, %c0_10], %15 {strides = array<i32>} : memref<8x256xf32, #tpu.memory_space<vmem>>, vector<8x256xf32>,
    return
  }
  func.func @transform_0(%arg0: i32) -> (i32, i32) {
    %c0_i32 = arith.constant 0 : i32
    %c0_i32_0 = arith.constant 0 : i32
    %c0_i32_1 = arith.constant 0 : i32
    return %c0_i32, %c0_i32_0 : i32, i32
  }
  func.func @transform_1(%arg0: i32) -> (i32, i32) {
    %c0_i32 = arith.constant 0 : i32
    %c0_i32_0 = arith.constant 0 : i32
    return %c0_i32, %arg0 : i32, i32
  }
  func.func @transform_2(%arg0: i32) -> (i32, i32) {
    %c0_i32 = arith.constant 0 : i32
    %c0_i32_0 = arith.constant 0 : i32
    return %c0_i32, %arg0 : i32, i32
  }
  func.func @transform_3(%arg0: i32) -> (i32, i32) {
    %c0_i32 = arith.constant 0 : i32
    %c0_i32_0 = arith.constant 0 : i32
    %c0_i32_1 = arith.constant 0 : i32
    return %c0_i32, %c0_i32_0 : i32, i32
  }
  func.func @transform_4(%arg0: i32) -> (i32, i32) {
    %c0_i32 = arith.constant 0 : i32
    %c0_i32_0 = arith.constant 0 : i32
    return %c0_i32, %arg0 : i32, i32
  }
}

</mosaic_0001>

<llo_original>
// kernel: tpu_custom_call.1
$region0: #{tpu_custom_call.1}
  #allocation0 [shape = 'u32[]', space=smem, size = 0x4, offset = 0x4, fixed_abs, tag = 'smem constant byte address 0x4 - core index']
  #allocation1 [shape = 'u32[72,128]{1,0:T(1,128)}', space=vmem, size = 0x9000, scoped, tag = 'internal scratch']
  %s0 = inlined_call_operand.vmem [shape: f32[8,3], index: 0, kind: input, shape index: {}]
  %s1 = inlined_call_operand.hbm [shape: f32[8,256], index: 1, kind: input, shape index: {}]
  %s2 = inlined_call_operand.hbm [shape: f32[8,256], index: 2, kind: input, shape index: {}]
  %s3 = inlined_call_operand.vmem [shape: f32[8,8], index: 3, kind: input, shape index: {}]
  %s4 = inlined_call_operand.hbm [shape: f32[8,256], index: 4, kind: output, shape index: {}]
  %s5 = sld [smem:[#allocation0]]
  $region34: #{tpu_custom_call.1} parent=0
    _
  %s7 = ssub.s32 1, %s5
  %s8 = scalar_select 0, %s7, %s5
  $region1: #{tpu_custom_call.1} parent=0
    #allocation2 [shape = 'u8[8192]{0}', space=vmem, size = 0x2000, scoped, tag = 'input window, operand 1, single buffered']
    #allocation3 [shape = 's32[1]{0}', space=sflag, size = 0x4, scoped, tag = 'scoped memory for tpu_custom_call.1']
    #allocation4 [shape = 's32[1]{0}', space=sflag, size = 0x4, scoped, tag = 'scoped memory for tpu_custom_call.1']
    #allocation5 [shape = 'u8[8192]{0}', space=vmem, size = 0x2000, scoped, tag = 'input window, operand 2, single buffered']
    #allocation6 [shape = 's32[1]{0}', space=sflag, size = 0x4, scoped, tag = 'scoped memory for tpu_custom_call.1']
    #allocation7 [shape = 'u8[8192]{0}', space=vmem, size = 0x2000, scoped, tag = 'output window, operand 0, single buffered']
    %9 = vsyncpa [#allocation3], 0
    %10 = vsyncpa [#allocation6], 0
    %11 = vsyncpa [#allocation4], 0
    // Predicated region
    $region2: #{tpu_custom_call.1} parent=1 // pred_check
      _
    $region3: #{tpu_custom_call.1} parent=1 // pred_check_branch
      %13 = sbr.rel (0) target = $region5
    $region4: #{tpu_custom_call.1} parent=1 // pred_region
      _
    $region5: #{tpu_custom_call.1} parent=1 // pred_fallthru
      _
    // Predicated region
    $region6: #{tpu_custom_call.1} parent=1 // pred_check
      _
    $region7: #{tpu_custom_call.1} parent=1 // pred_check_branch
      %15 = sbr.rel (0) target = $region9
    $region8: #{tpu_custom_call.1} parent=1 // pred_region
      %17 = vsyncadd [#allocation3], 0
      %s19 = sshll.u32 %s1, 4
      %s20 = int_to_ptr.hbm [resolvable:$true] %s19
      %s21 = sshll.u32 [#allocation2], 4
      %s22 = int_to_ptr.vmem [resolvable:$true] %s21
      %24 = dma.hbm_to_vmem [thread:$0]  %s20, 256, %s22, [#allocation3]
    $region9: #{tpu_custom_call.1} parent=1 // pred_fallthru
      _
    // Predicated region
    $region10: #{tpu_custom_call.1} parent=1 // pred_check
      _
    $region11: #{tpu_custom_call.1} parent=1 // pred_check_branch
      %26 = sbr.rel (0) target = $region13
    $region12: #{tpu_custom_call.1} parent=1 // pred_region
      %28 = vsyncadd [#allocation6], 0
      %s30 = sshll.u32 %s2, 4
      %s31 = int_to_ptr.hbm [resolvable:$true] %s30
      %s32 = sshll.u32 [#allocation5], 4
      %s33 = int_to_ptr.vmem [resolvable:$true] %s32
      %35 = dma.hbm_to_vmem [thread:$0]  %s31, 256, %s33, [#allocation6]
    $region13: #{tpu_custom_call.1} parent=1 // pred_fallthru
      _
    // Predicated region
    $region14: #{tpu_custom_call.1} parent=1 // pred_check
      _
    $region15: #{tpu_custom_call.1} parent=1 // pred_check_branch
      %37 = sbr.rel (0) target = $region17
    $region16: #{tpu_custom_call.1} parent=1 // pred_region
      _
    $region17: #{tpu_custom_call.1} parent=1 // pred_fallthru
      _
    // Predicated region
    $region18: #{tpu_custom_call.1} parent=1 // pred_check
      _
    $region19: #{tpu_custom_call.1} parent=1 // pred_check_branch
      %39 = sbr.rel (0) target = $region21
    $region20: #{tpu_custom_call.1} parent=1 // pred_region
      %41 = dma.done [#allocation3], 256
    $region21: #{tpu_custom_call.1} parent=1 // pred_fallthru
      _
    // Predicated region
    $region22: #{tpu_custom_call.1} parent=1 // pred_check
      _
    $region23: #{tpu_custom_call.1} parent=1 // pred_check_branch
      %43 = sbr.rel (0) target = $region25
    $region24: #{tpu_custom_call.1} parent=1 // pred_region
      %45 = dma.done [#allocation6], 256
    $region25: #{tpu_custom_call.1} parent=1 // pred_fallthru
      _
    %v46 = vld [vmem:[%s0] sm:$0xff]
    %v47 = vld [vmem:[#allocation2] sm:$0xff]
    %v48 = vld [vmem:[#allocation2 + $0x8] sm:$0xff]
    %v49 = vld [vmem:[#allocation5] sm:$0xff]
    %v50 = vld [vmem:[#allocation5 + $0x8] sm:$0xff]
    %52 = vset.pattern.permute.xlu0 0
    %53 = vperm.xlu0 %52, %v46
    %v54 = vpop.permute.xlu0 %53
    %v56 = vmul.f32 %v54, %v47
    %v57 = vmul.f32 %v54, %v48
    %58 = vset.pattern.permute.xlu0 1
    %59 = vperm.xlu0 %58, %v46
    %v60 = vpop.permute.xlu0 %59
    %v62 = vmul.f32 %v60, %v49
    %v63 = vmul.f32 %v60, %v50
    %v64 = vadd.f32 %v56, %v62
    %v65 = vadd.f32 %v57, %v63
    %v66 = vld [vmem:[%s3] sm:$0xff]
    %67 = vset.pattern.permute.xlu0 2
    %68 = vperm.xlu0 %67, %v46
    %v69 = vpop.permute.xlu0 %68
    %vm71 = vcmask 64512
    %v73 = vsel %vm71, %v66, 0
    %75 = vmatpush.msra.mxu0 0.0
    %76 = vmatpush.msra.mxu0 0.0
    %77 = vmatpush.msra.mxu0 0.0
    %78 = vmatpush.msra.mxu0 0.0
    %79 = vmatpush.msra.mxu0 0.0
    %80 = vmatpush.msra.mxu0 0.0
    %81 = vmatpush.msra.mxu0 0.0
    %82 = vmatpush.msra.mxu0 0.0
    %83 = vmatpush.msra.mxu0 0.0
    %84 = vmatpush.msra.mxu0 0.0
    %85 = vmatpush.msra.mxu0 0.0
    %86 = vmatpush.msra.mxu0 0.0
    %87 = vmatpush.msra.mxu0 0.0
    %88 = vmatpush.msra.mxu0 0.0
    %89 = vmatpush.msra.mxu0 0.0
    %90 = vmatpush.msra.mxu0 %v64
    %91 = vmatmul.f32.gmra.mxu0 %v73
    %v92 = vpop.f32.mrf.mxu0
    %v93 = vadd.f32 %v69, %v92
    %94 = vdwg.mxu0
    %95 = vmatpush.msra.mxu0 0.0
    %96 = vmatpush.msra.mxu0 0.0
    %97 = vmatpush.msra.mxu0 0.0
    %98 = vmatpush.msra.mxu0 0.0
    %99 = vmatpush.msra.mxu0 0.0
    %100 = vmatpush.msra.mxu0 0.0
    %101 = vmatpush.msra.mxu0 0.0
    %102 = vmatpush.msra.mxu0 0.0
    %103 = vmatpush.msra.mxu0 0.0
    %104 = vmatpush.msra.mxu0 0.0
    %105 = vmatpush.msra.mxu0 0.0
    %106 = vmatpush.msra.mxu0 0.0
    %107 = vmatpush.msra.mxu0 0.0
    %108 = vmatpush.msra.mxu0 0.0
    %109 = vmatpush.msra.mxu0 0.0
    %110 = vmatpush.msra.mxu0 %v65
    %111 = vmatmul.f32.gmra.mxu0 %v73
    %v112 = vpop.f32.mrf.mxu0
    %v113 = vadd.f32 %v69, %v112
    %114 = vdwg.mxu0
    %v115 = vsub.f32 %v93, %v49
    %v116 = vsub.f32 %v113, %v50
    %v117 = vmul.f32 %v115, %v115
    %v118 = vmul.f32 %v116, %v116
    %119 = vst [vmem:[#allocation7] sm:$0xff] %v117
    %120 = vst [vmem:[#allocation7 + $0x8] sm:$0xff] %v118
    // Predicated region
    $region26: #{tpu_custom_call.1} parent=1 // pred_check
      _
    $region27: #{tpu_custom_call.1} parent=1 // pred_check_branch
      %122 = sbr.rel (0) target = $region29
    $region28: #{tpu_custom_call.1} parent=1 // pred_region
      %124 = vsyncadd [#allocation4], 0
      %s126 = sshll.u32 [#allocation7], 4
      %s127 = int_to_ptr.vmem [resolvable:$true] %s126
      %s128 = sshll.u32 %s4, 4
      %s129 = int_to_ptr.hbm [resolvable:$true] %s128
      %131 = dma.vmem_to_hbm [thread:$0]  %s127, 256, %s129, [#allocation4]
    $region29: #{tpu_custom_call.1} parent=1 // pred_fallthru
      _
    // Predicated region
    $region30: #{tpu_custom_call.1} parent=1 // pred_check
      _
    $region31: #{tpu_custom_call.1} parent=1 // pred_check_branch
      %133 = sbr.rel (0) target = $region33
    $region32: #{tpu_custom_call.1} parent=1 // pred_region
      %135 = dma.done [#allocation4], 256
    $region33: #{tpu_custom_call.1} parent=1 // pred_fallthru
      _
    %136 = vsyncpa [#allocation3], 1
    %137 = vsyncpa [#allocation6], 1
    %138 = vsyncpa [#allocation4], 1

</llo_original>
